<compile_context>
chip_gen: v6e
topology: v6e:2x2x1
jax: 0.10.0
libtpu: 0.0.40
codegen_flags: <defaults>
</compile_context>

<pallas_src>
import jax
import jax.numpy as jnp
from jax.experimental import pallas as pl
from jax.experimental.pallas import tpu as pltpu


def _avgpool_fc_kernel(x_ref, w_ref, b_ref, o_ref):
    # x_ref: (TILE_N, HW, C)   input dtype (f32/bf16)
    # w_ref: (C, NC_PAD)       f32, already scaled by 1/(H*W)
    # b_ref: (1, NC_PAD)       f32
    # o_ref: (TILE_N, NC_PAD)  f32
    x = x_ref[...].astype(jnp.float32)            # accumulate in f32
    pooled_sum = jnp.sum(x, axis=1)               # (TILE_N, C) sublane-axis reduce
    y = jnp.dot(pooled_sum, w_ref[...],
                preferred_element_type=jnp.float32) + b_ref[...]
    o_ref[...] = y.astype(o_ref.dtype)


def avgpool_fc_classifier(x, fc_weight, fc_bias, *, tile_n=128):
    """x: (N, C, H, W); fc_weight: (num_classes, C); fc_bias: (num_classes,).

    Returns (N, num_classes) float32.
    """
    n, c, h, w = x.shape
    hw = h * w
    num_classes = fc_weight.shape[0]
    assert fc_weight.shape[1] == c, "fc_features must equal channel count"

    # ---- wrapper-side layout plumbing (no compute hoisted into the kernel) ----
    # (N, C, H, W) -> (N, HW, C): C lane-dense, HW on the sublane axis.
    x_nhwc = jnp.transpose(x.reshape(n, c, hw), (0, 2, 1))   # keep input dtype

    # Batch tiling: tile_n samples per grid step (multiple of 8), pad N.
    if n <= tile_n:
        tn, n_pad = n, n
    else:
        tn = tile_n
        n_pad = pl.cdiv(n, tn) * tn
    if n_pad > n:
        x_nhwc = jnp.pad(x_nhwc, ((0, n_pad - n), (0, 0), (0, 0)))

    # Pad num_classes to a lane-dense multiple of 128; pre-transpose weight to
    # (C, NC_PAD) and fold the 1/(H*W) pooling scale into it.
    nc_pad = pl.cdiv(num_classes, 128) * 128
    w_t = fc_weight.astype(jnp.float32).T / jnp.float32(hw)       # (C, num_classes)
    w_t = jnp.pad(w_t, ((0, 0), (0, nc_pad - num_classes)))       # (C, NC_PAD)
    b_p = jnp.pad(fc_bias.astype(jnp.float32),
                  (0, nc_pad - num_classes)).reshape(1, nc_pad)   # (1, NC_PAD)

    grid = (n_pad // tn,)

    out = pl.pallas_call(
        _avgpool_fc_kernel,
        out_shape=jax.ShapeDtypeStruct((n_pad, nc_pad), jnp.float32),
        grid_spec=pltpu.PrefetchScalarGridSpec(
            num_scalar_prefetch=0,
            grid=grid,
            in_specs=[
                # x tile: full (HW, C) plane per sample block (last two dims are
                # full array extents -> always layout-legal).
                pl.BlockSpec((tn, hw, c), lambda i: (i, 0, 0)),
                # weight / bias: constant index_map -> resident in VMEM.
                pl.BlockSpec((c, nc_pad), lambda i: (0, 0)),
                pl.BlockSpec((1, nc_pad), lambda i: (0, 0)),
            ],
            out_specs=pl.BlockSpec((tn, nc_pad), lambda i: (i, 0)),
        ),
        compiler_params=pltpu.CompilerParams(
            dimension_semantics=("parallel",),      # megacore-shardable on v7x
            vmem_limit_bytes=64 * 1024 * 1024,      # safe on v5e/v6e/v7x
        ),
    )(x_nhwc, w_t, b_p)

    # Strip N / num_classes padding.
    return out[:n, :num_classes]


if __name__ == "__main__":
    # Small shapes consistent with the module: N=2, C=fc_features=4, 16x16
    # spatial, num_classes=8.
    N, C, H, W = 2, 4, 16, 16
    NUM_CLASSES = 8

    key = jax.random.PRNGKey(0)
    kx, kw, kb = jax.random.split(key, 3)
    x = jax.random.normal(kx, (N, C, H, W), dtype=jnp.float32)
    # Deterministic synthetic Linear params (shapes per nn.Linear(C, NUM_CLASSES)).
    fc_weight = jax.random.normal(kw, (NUM_CLASSES, C), dtype=jnp.float32) * 0.1
    fc_bias = jax.random.normal(kb, (NUM_CLASSES,), dtype=jnp.float32) * 0.1

    out = avgpool_fc_classifier(x, fc_weight, fc_bias)
    out = jax.block_until_ready(out)

    # Pure-JAX reference (AdaptiveAvgPool2d(1,1) -> flatten -> Linear).
    ref = jnp.mean(x, axis=(2, 3)) @ fc_weight.T + fc_bias
    assert out.shape == (N, NUM_CLASSES)
    assert jnp.allclose(out, ref, atol=1e-5, rtol=1e-4), "mismatch vs reference"

    print("KERNEL_OK")
</pallas_src>

<mosaic_0001>
module attributes {stable_mosaic.version = 11 : i64} {
  func.func @_avgpool_fc_kernel(%arg0: i32, %arg1: memref<2x256x4xf32, #tpu.memory_space<vmem>>, %arg2: memref<4x128xf32, #tpu.memory_space<vmem>>, %arg3: memref<1x128xf32, #tpu.memory_space<vmem>>, %arg4: memref<2x128xf32, #tpu.memory_space<vmem>>) attributes {dimension_semantics = [#tpu.dimension_semantics<parallel>], iteration_bounds = array<i64: 1>, scalar_prefetch = 0 : i64, scratch_operands = 0 : i64, tpu.core_type = #tpu.core_type<tc>, window_params = [{transform_indices = @transform_0, window_bounds = array<i64: 2, 256, 4>}, {pipeline_mode = #tpu.pipeline_mode<synchronous>, transform_indices = @transform_1, window_bounds = array<i64: 4, 128>}, {pipeline_mode = #tpu.pipeline_mode<synchronous>, transform_indices = @transform_2, window_bounds = array<i64: 1, 128>}, {transform_indices = @transform_3, window_bounds = array<i64: 2, 128>}]} {
    %c0 = arith.constant 0 : index
    %c0_0 = arith.constant 0 : index
    %c0_1 = arith.constant 0 : index
    %0 = vector.load %arg1[%c0, %c0_0, %c0_1] : memref<2x256x4xf32, #tpu.memory_space<vmem>>, vector<2x256x4xf32>
    %cst = arith.constant dense<0.000000e+00> : vector<2x4xf32>
    %1 = vector.multi_reduction <add>, %0, %cst [1] : vector<2x256x4xf32> to vector<2x4xf32>
    %c0_2 = arith.constant 0 : index
    %c0_3 = arith.constant 0 : index
    %2 = vector.load %arg2[%c0_2, %c0_3] : memref<4x128xf32, #tpu.memory_space<vmem>>, vector<4x128xf32>
    %cst_4 = arith.constant dense<0.000000e+00> : vector<2x128xf32>
    %3 = tpu.matmul %1, %2, %cst_4 {dimension_numbers = #tpu.dot_dimension_numbers<[1], [0], [0], [1], [0, 0, 1, 1], [], []>} : vector<2x4xf32>, vector<4x128xf32>, vector<2x128xf32> -> vector<2x128xf32>
    %c0_5 = arith.constant 0 : index
    %c0_6 = arith.constant 0 : index
    %4 = vector.load %arg3[%c0_5, %c0_6] : memref<1x128xf32, #tpu.memory_space<vmem>>, vector<1x128xf32>
    %5 = vector.broadcast %4 : vector<1x128xf32> to vector<2x128xf32>
    %6 = arith.addf %3, %5 : vector<2x128xf32>
    %c0_7 = arith.constant 0 : index
    %c0_8 = arith.constant 0 : index
    %7 = vector.load %arg4[%c0_7, %c0_8] : memref<2x128xf32, #tpu.memory_space<vmem>>, vector<2x128xf32>
    tpu.vector_store %arg4[%c0_7, %c0_8], %6 {strides = array<i32>} : memref<2x128xf32, #tpu.memory_space<vmem>>, vector<2x128xf32>,
    return
  }
  func.func @transform_0(%arg0: i32) -> (i32, i32, i32) {
    %c0_i32 = arith.constant 0 : i32
    %c0_i32_0 = arith.constant 0 : i32
    %c0_i32_1 = arith.constant 0 : i32
    return %arg0, %c0_i32, %c0_i32_0 : i32, i32, i32
  }
  func.func @transform_1(%arg0: i32) -> (i32, i32) {
    %c0_i32 = arith.constant 0 : i32
    %c0_i32_0 = arith.constant 0 : i32
    %c0_i32_1 = arith.constant 0 : i32
    return %c0_i32, %c0_i32_0 : i32, i32
  }
  func.func @transform_2(%arg0: i32) -> (i32, i32) {
    %c0_i32 = arith.constant 0 : i32
    %c0_i32_0 = arith.constant 0 : i32
    %c0_i32_1 = arith.constant 0 : i32
    return %c0_i32, %c0_i32_0 : i32, i32
  }
  func.func @transform_3(%arg0: i32) -> (i32, i32) {
    %c0_i32 = arith.constant 0 : i32
    %c0_i32_0 = arith.constant 0 : i32
    return %arg0, %c0_i32 : i32, i32
  }
}

</mosaic_0001>

<llo_original>
// kernel: tpu_custom_call.1
$region0: #{tpu_custom_call.1}
  #allocation0 [shape = 'u32[]', space=smem, size = 0x4, offset = 0x4, fixed_abs, tag = 'smem constant byte address 0x4 - core index']
  #allocation1 [shape = 'u32[144,128]{1,0:T(1,128)}', space=vmem, size = 0x12000, scoped, tag = 'internal scratch']
  %s0 = inlined_call_operand.vmem [shape: f32[2,256,4], index: 0, kind: input, shape index: {}]
  %s1 = inlined_call_operand.vmem [shape: f32[4,128], index: 1, kind: input, shape index: {}]
  %s2 = inlined_call_operand.vmem [shape: f32[1,128], index: 2, kind: input, shape index: {}]
  %s3 = inlined_call_operand.hbm [shape: f32[2,128], index: 3, kind: output, shape index: {}]
  %s4 = sld [smem:[#allocation0]]
  $region22: #{tpu_custom_call.1} parent=0
    _
  %s6 = ssub.s32 1, %s4
  %s7 = scalar_select 0, %s6, %s4
  $region1: #{tpu_custom_call.1} parent=0
    #allocation2 [shape = 'u8[1024]{0}', space=vmem, size = 0x400, scoped, tag = 'output window, operand 0, single buffered']
    #allocation3 [shape = 's32[1]{0}', space=sflag, size = 0x4, scoped, tag = 'scoped memory for tpu_custom_call.1']
    %8 = vsyncpa [#allocation3], 0
    // Predicated region
    $region2: #{tpu_custom_call.1} parent=1 // pred_check
      _
    $region3: #{tpu_custom_call.1} parent=1 // pred_check_branch
      %10 = sbr.rel (0) target = $region5
    $region4: #{tpu_custom_call.1} parent=1 // pred_region
      _
    $region5: #{tpu_custom_call.1} parent=1 // pred_fallthru
      _
    // Predicated region
    $region6: #{tpu_custom_call.1} parent=1 // pred_check
      _
    $region7: #{tpu_custom_call.1} parent=1 // pred_check_branch
      %12 = sbr.rel (0) target = $region9
    $region8: #{tpu_custom_call.1} parent=1 // pred_region
      _
    $region9: #{tpu_custom_call.1} parent=1 // pred_fallthru
      _
    // Predicated region
    $region10: #{tpu_custom_call.1} parent=1 // pred_check
      _
    $region11: #{tpu_custom_call.1} parent=1 // pred_check_branch
      %14 = sbr.rel (0) target = $region13
    $region12: #{tpu_custom_call.1} parent=1 // pred_region
      _
    $region13: #{tpu_custom_call.1} parent=1 // pred_fallthru
      _
    %v15 = vld [vmem:[%s0] sm:$0xff]
    %v16 = vld [vmem:[%s0 + $0x8] sm:$0xff]
    %v17 = vld [vmem:[%s0 + $0x10] sm:$0xff]
    %v18 = vld [vmem:[%s0 + $0x18] sm:$0xff]
    %v19 = vld [vmem:[%s0 + $0x20] sm:$0xff]
    %v20 = vld [vmem:[%s0 + $0x28] sm:$0xff]
    %v21 = vld [vmem:[%s0 + $0x30] sm:$0xff]
    %v22 = vld [vmem:[%s0 + $0x38] sm:$0xff]
    %v23 = vld [vmem:[%s0 + $0x40] sm:$0xff]
    %v24 = vld [vmem:[%s0 + $0x48] sm:$0xff]
    %v25 = vld [vmem:[%s0 + $0x50] sm:$0xff]
    %v26 = vld [vmem:[%s0 + $0x58] sm:$0xff]
    %v27 = vld [vmem:[%s0 + $0x60] sm:$0xff]
    %v28 = vld [vmem:[%s0 + $0x68] sm:$0xff]
    %v29 = vld [vmem:[%s0 + $0x70] sm:$0xff]
    %v30 = vld [vmem:[%s0 + $0x78] sm:$0xff]
    %v31 = vld [vmem:[%s0 + $0x80] sm:$0xff]
    %v32 = vld [vmem:[%s0 + $0x88] sm:$0xff]
    %v33 = vld [vmem:[%s0 + $0x90] sm:$0xff]
    %v34 = vld [vmem:[%s0 + $0x98] sm:$0xff]
    %v35 = vld [vmem:[%s0 + $0xa0] sm:$0xff]
    %v36 = vld [vmem:[%s0 + $0xa8] sm:$0xff]
    %v37 = vld [vmem:[%s0 + $0xb0] sm:$0xff]
    %v38 = vld [vmem:[%s0 + $0xb8] sm:$0xff]
    %v39 = vld [vmem:[%s0 + $0xc0] sm:$0xff]
    %v40 = vld [vmem:[%s0 + $0xc8] sm:$0xff]
    %v41 = vld [vmem:[%s0 + $0xd0] sm:$0xff]
    %v42 = vld [vmem:[%s0 + $0xd8] sm:$0xff]
    %v43 = vld [vmem:[%s0 + $0xe0] sm:$0xff]
    %v44 = vld [vmem:[%s0 + $0xe8] sm:$0xff]
    %v45 = vld [vmem:[%s0 + $0xf0] sm:$0xff]
    %v46 = vld [vmem:[%s0 + $0xf8] sm:$0xff]
    %v47 = vld [vmem:[%s0 + $0x100] sm:$0xff]
    %v48 = vld [vmem:[%s0 + $0x108] sm:$0xff]
    %v49 = vld [vmem:[%s0 + $0x110] sm:$0xff]
    %v50 = vld [vmem:[%s0 + $0x118] sm:$0xff]
    %v51 = vld [vmem:[%s0 + $0x120] sm:$0xff]
    %v52 = vld [vmem:[%s0 + $0x128] sm:$0xff]
    %v53 = vld [vmem:[%s0 + $0x130] sm:$0xff]
    %v54 = vld [vmem:[%s0 + $0x138] sm:$0xff]
    %v55 = vld [vmem:[%s0 + $0x140] sm:$0xff]
    %v56 = vld [vmem:[%s0 + $0x148] sm:$0xff]
    %v57 = vld [vmem:[%s0 + $0x150] sm:$0xff]
    %v58 = vld [vmem:[%s0 + $0x158] sm:$0xff]
    %v59 = vld [vmem:[%s0 + $0x160] sm:$0xff]
    %v60 = vld [vmem:[%s0 + $0x168] sm:$0xff]
    %v61 = vld [vmem:[%s0 + $0x170] sm:$0xff]
    %v62 = vld [vmem:[%s0 + $0x178] sm:$0xff]
    %v63 = vld [vmem:[%s0 + $0x180] sm:$0xff]
    %v64 = vld [vmem:[%s0 + $0x188] sm:$0xff]
    %v65 = vld [vmem:[%s0 + $0x190] sm:$0xff]
    %v66 = vld [vmem:[%s0 + $0x198] sm:$0xff]
    %v67 = vld [vmem:[%s0 + $0x1a0] sm:$0xff]
    %v68 = vld [vmem:[%s0 + $0x1a8] sm:$0xff]
    %v69 = vld [vmem:[%s0 + $0x1b0] sm:$0xff]
    %v70 = vld [vmem:[%s0 + $0x1b8] sm:$0xff]
    %v71 = vld [vmem:[%s0 + $0x1c0] sm:$0xff]
    %v72 = vld [vmem:[%s0 + $0x1c8] sm:$0xff]
    %v73 = vld [vmem:[%s0 + $0x1d0] sm:$0xff]
    %v74 = vld [vmem:[%s0 + $0x1d8] sm:$0xff]
    %v75 = vld [vmem:[%s0 + $0x1e0] sm:$0xff]
    %v76 = vld [vmem:[%s0 + $0x1e8] sm:$0xff]
    %v77 = vld [vmem:[%s0 + $0x1f0] sm:$0xff]
    %v78 = vld [vmem:[%s0 + $0x1f8] sm:$0xff]
    %vm79 = vcmask 31744
    %v80 = vsel %vm79, %v15, 0.0
    %v81 = vsel %vm79, %v16, 0.0
    %v82 = vadd.f32 %v80, %v81
    %v83 = vsel %vm79, %v17, 0.0
    %v84 = vadd.f32 %v82, %v83
    %v85 = vsel %vm79, %v18, 0.0
    %v86 = vadd.f32 %v84, %v85
    %v87 = vsel %vm79, %v19, 0.0
    %v88 = vadd.f32 %v86, %v87
    %v89 = vsel %vm79, %v20, 0.0
    %v90 = vadd.f32 %v88, %v89
    %v91 = vsel %vm79, %v21, 0.0
    %v92 = vadd.f32 %v90, %v91
    %v93 = vsel %vm79, %v22, 0.0
    %v94 = vadd.f32 %v92, %v93
    %v95 = vsel %vm79, %v23, 0.0
    %v96 = vadd.f32 %v94, %v95
    %v97 = vsel %vm79, %v24, 0.0
    %v98 = vadd.f32 %v96, %v97
    %v99 = vsel %vm79, %v25, 0.0
    %v100 = vadd.f32 %v98, %v99
    %v101 = vsel %vm79, %v26, 0.0
    %v102 = vadd.f32 %v100, %v101
    %v103 = vsel %vm79, %v27, 0.0
    %v104 = vadd.f32 %v102, %v103
    %v105 = vsel %vm79, %v28, 0.0
    %v106 = vadd.f32 %v104, %v105
    %v107 = vsel %vm79, %v29, 0.0
    %v108 = vadd.f32 %v106, %v107
    %v109 = vsel %vm79, %v30, 0.0
    %v110 = vadd.f32 %v108, %v109
    %v111 = vsel %vm79, %v31, 0.0
    %v112 = vadd.f32 %v110, %v111
    %v113 = vsel %vm79, %v32, 0.0
    %v114 = vadd.f32 %v112, %v113
    %v115 = vsel %vm79, %v33, 0.0
    %v116 = vadd.f32 %v114, %v115
    %v117 = vsel %vm79, %v34, 0.0
    %v118 = vadd.f32 %v116, %v117
    %v119 = vsel %vm79, %v35, 0.0
    %v120 = vadd.f32 %v118, %v119
    %v121 = vsel %vm79, %v36, 0.0
    %v122 = vadd.f32 %v120, %v121
    %v123 = vsel %vm79, %v37, 0.0
    %v124 = vadd.f32 %v122, %v123
    %v125 = vsel %vm79, %v38, 0.0
    %v126 = vadd.f32 %v124, %v125
    %v127 = vsel %vm79, %v39, 0.0
    %v128 = vadd.f32 %v126, %v127
    %v129 = vsel %vm79, %v40, 0.0
    %v130 = vadd.f32 %v128, %v129
    %v131 = vsel %vm79, %v41, 0.0
    %v132 = vadd.f32 %v130, %v131
    %v133 = vsel %vm79, %v42, 0.0
    %v134 = vadd.f32 %v132, %v133
    %v135 = vsel %vm79, %v43, 0.0
    %v136 = vadd.f32 %v134, %v135
    %v137 = vsel %vm79, %v44, 0.0
    %v138 = vadd.f32 %v136, %v137
    %v139 = vsel %vm79, %v45, 0.0
    %v140 = vadd.f32 %v138, %v139
    %v141 = vsel %vm79, %v46, 0.0
    %v142 = vadd.f32 %v140, %v141
    %v143 = vrot.slane %v142, 4
    %v144 = vadd.f32 %v142, %v143
    %v145 = vrot.slane %v144, 2
    %v146 = vadd.f32 %v144, %v145
    %v147 = vrot.slane %v146, 1
    %v148 = vadd.f32 %v146, %v147
    %v149 = vsel %vm79, %v47, 0.0
    %v150 = vsel %vm79, %v48, 0.0
    %v151 = vadd.f32 %v149, %v150
    %v152 = vsel %vm79, %v49, 0.0
    %v153 = vadd.f32 %v151, %v152
    %v154 = vsel %vm79, %v50, 0.0
    %v155 = vadd.f32 %v153, %v154
    %v156 = vsel %vm79, %v51, 0.0
    %v157 = vadd.f32 %v155, %v156
    %v158 = vsel %vm79, %v52, 0.0
    %v159 = vadd.f32 %v157, %v158
    %v160 = vsel %vm79, %v53, 0.0
    %v161 = vadd.f32 %v159, %v160
    %v162 = vsel %vm79, %v54, 0.0
    %v163 = vadd.f32 %v161, %v162
    %v164 = vsel %vm79, %v55, 0.0
    %v165 = vadd.f32 %v163, %v164
    %v166 = vsel %vm79, %v56, 0.0
    %v167 = vadd.f32 %v165, %v166
    %v168 = vsel %vm79, %v57, 0.0
    %v169 = vadd.f32 %v167, %v168
    %v170 = vsel %vm79, %v58, 0.0
    %v171 = vadd.f32 %v169, %v170
    %v172 = vsel %vm79, %v59, 0.0
    %v173 = vadd.f32 %v171, %v172
    %v174 = vsel %vm79, %v60, 0.0
    %v175 = vadd.f32 %v173, %v174
    %v176 = vsel %vm79, %v61, 0.0
    %v177 = vadd.f32 %v175, %v176
    %v178 = vsel %vm79, %v62, 0.0
    %v179 = vadd.f32 %v177, %v178
    %v180 = vsel %vm79, %v63, 0.0
    %v181 = vadd.f32 %v179, %v180
    %v182 = vsel %vm79, %v64, 0.0
    %v183 = vadd.f32 %v181, %v182
    %v184 = vsel %vm79, %v65, 0.0
    %v185 = vadd.f32 %v183, %v184
    %v186 = vsel %vm79, %v66, 0.0
    %v187 = vadd.f32 %v185, %v186
    %v188 = vsel %vm79, %v67, 0.0
    %v189 = vadd.f32 %v187, %v188
    %v190 = vsel %vm79, %v68, 0.0
    %v191 = vadd.f32 %v189, %v190
    %v192 = vsel %vm79, %v69, 0.0
    %v193 = vadd.f32 %v191, %v192
    %v194 = vsel %vm79, %v70, 0.0
    %v195 = vadd.f32 %v193, %v194
    %v196 = vsel %vm79, %v71, 0.0
    %v197 = vadd.f32 %v195, %v196
    %v198 = vsel %vm79, %v72, 0.0
    %v199 = vadd.f32 %v197, %v198
    %v200 = vsel %vm79, %v73, 0.0
    %v201 = vadd.f32 %v199, %v200
    %v202 = vsel %vm79, %v74, 0.0
    %v203 = vadd.f32 %v201, %v202
    %v204 = vsel %vm79, %v75, 0.0
    %v205 = vadd.f32 %v203, %v204
    %v206 = vsel %vm79, %v76, 0.0
    %v207 = vadd.f32 %v205, %v206
    %v208 = vsel %vm79, %v77, 0.0
    %v209 = vadd.f32 %v207, %v208
    %v210 = vsel %vm79, %v78, 0.0
    %v211 = vadd.f32 %v209, %v210
    %v212 = vrot.slane %v211, 4
    %v213 = vadd.f32 %v211, %v212
    %v214 = vrot.slane %v213, 2
    %v215 = vadd.f32 %v213, %v214
    %v216 = vrot.slane %v215, 1
    %v217 = vadd.f32 %v215, %v216
    %v218 = vld [vmem:[%s1] sm:$0xf]
    %v219 = vld [vmem:[%s2] sm:$0x1]
    %v221 = vlaneseq
    %v222 = vshrl.u32 %v221, 7
    %v223 = vsub.s32 0, %v222
    %v224 = vrot.slane %v219, %v223
    %vm228 = vcmask 1041409
    %v229 = vsel %vm228, %v217, %v148
    %v230 = vsel %vm79, %v229, 0
    %vm232 = vcmask 1043456
    %v234 = vsel %vm232, %v218, 0
    %236 = vmatprep.subr.mxu0 0.0
    %237 = vmatpush1.msra.mxu0 0.0
    %238 = vmatprep.subr.mxu0 0.0
    %239 = vmatpush1.msra.mxu0 0.0
    %240 = vmatprep.subr.mxu0 0.0
    %241 = vmatpush1.msra.mxu0 0.0
    %242 = vmatprep.subr.mxu0 0.0
    %243 = vmatpush1.msra.mxu0 0.0
    %244 = vmatprep.subr.mxu0 0.0
    %245 = vmatpush1.msra.mxu0 0.0
    %246 = vmatprep.subr.mxu0 0.0
    %247 = vmatpush1.msra.mxu0 0.0
    %248 = vmatprep.subr.mxu0 0.0
    %249 = vmatpush1.msra.mxu0 0.0
    %250 = vmatprep.subr.mxu0 0.0
    %251 = vmatpush1.msra.mxu0 0.0
    %252 = vmatprep.subr.mxu0 0.0
    %253 = vmatpush1.msra.mxu0 0.0
    %254 = vmatprep.subr.mxu0 0.0
    %255 = vmatpush1.msra.mxu0 0.0
    %256 = vmatprep.subr.mxu0 0.0
    %257 = vmatpush1.msra.mxu0 0.0
    %258 = vmatprep.subr.mxu0 0.0
    %259 = vmatpush1.msra.mxu0 0.0
    %260 = vmatprep.subr.mxu0 0.0
    %261 = vmatpush1.msra.mxu0 0.0
    %262 = vmatprep.subr.mxu0 0.0
    %263 = vmatpush1.msra.mxu0 0.0
    %264 = vmatprep.subr.mxu0 0.0
    %265 = vmatpush1.msra.mxu0 0.0
    %266 = vmatprep.subr.mxu0 0.0
    %267 = vmatpush1.msra.mxu0 %v234
    %268 = vmatprep.subr.mxu0 0.0
    %269 = vmatpush2.msra.mxu0 0.0
    %270 = vmatprep.subr.mxu0 0.0
    %271 = vmatpush2.msra.mxu0 0.0
    %272 = vmatprep.subr.mxu0 0.0
    %273 = vmatpush2.msra.mxu0 0.0
    %274 = vmatprep.subr.mxu0 0.0
    %275 = vmatpush2.msra.mxu0 0.0
    %276 = vmatprep.subr.mxu0 0.0
    %277 = vmatpush2.msra.mxu0 0.0
    %278 = vmatprep.subr.mxu0 0.0
    %279 = vmatpush2.msra.mxu0 0.0
    %280 = vmatprep.subr.mxu0 0.0
    %281 = vmatpush2.msra.mxu0 0.0
    %282 = vmatprep.subr.mxu0 0.0
    %283 = vmatpush2.msra.mxu0 0.0
    %284 = vmatprep.subr.mxu0 0.0
    %285 = vmatpush2.msra.mxu0 0.0
    %286 = vmatprep.subr.mxu0 0.0
    %287 = vmatpush2.msra.mxu0 0.0
    %288 = vmatprep.subr.mxu0 0.0
    %289 = vmatpush2.msra.mxu0 0.0
    %290 = vmatprep.subr.mxu0 0.0
    %291 = vmatpush2.msra.mxu0 0.0
    %292 = vmatprep.subr.mxu0 0.0
    %293 = vmatpush2.msra.mxu0 0.0
    %294 = vmatprep.subr.mxu0 0.0
    %295 = vmatpush2.msra.mxu0 0.0
    %296 = vmatprep.subr.mxu0 0.0
    %297 = vmatpush2.msra.mxu0 0.0
    %298 = vmatprep.subr.mxu0 0.0
    %299 = vmatpush2.msra.mxu0 0.0
    %300 = vmatprep.mubr.f32.mxu0 0.0
    %301 = vmatmul.mubr.f32.gmra.mxu0 %v230
    %v302 = vpop.f32.mrf.mxu0
    %v303 = vadd.f32 %v224, %v302
    %v304 = vpop.f32.mrf.mxu0
    %305 = vdwg.mxu0
    %306 = vst [vmem:[#allocation2] sm:$0x3] %v303
    // Predicated region
    $region14: #{tpu_custom_call.1} parent=1 // pred_check
      _
    $region15: #{tpu_custom_call.1} parent=1 // pred_check_branch
      %308 = sbr.rel (0) target = $region17
    $region16: #{tpu_custom_call.1} parent=1 // pred_region
      %s310 = ssub.s32 32, 32
      %311 = vsyncadd [#allocation3], %s310
      %s313 = sshll.u32 [#allocation2], 4
      %s314 = int_to_ptr.vmem [resolvable:$true] %s313
      %316 = dma.vmem_to_hbm [thread:$0]  %s314, 32, %s3, [#allocation3]
    $region17: #{tpu_custom_call.1} parent=1 // pred_fallthru
      _
    // Predicated region
    $region18: #{tpu_custom_call.1} parent=1 // pred_check
      _
    $region19: #{tpu_custom_call.1} parent=1 // pred_check_branch
      %318 = sbr.rel (0) target = $region21
    $region20: #{tpu_custom_call.1} parent=1 // pred_region
      %319 = dma.done [#allocation3], 32
    $region21: #{tpu_custom_call.1} parent=1 // pred_fallthru
      _
    %320 = vsyncpa [#allocation3], 1

</llo_original>
